<compile_context>
chip_gen: v7x
topology: tpu7x:2x2x1
jax: 0.10.0
libtpu: 0.0.40
codegen_flags: <defaults>
</compile_context>

<pallas_src>
import functools

import jax
import jax.numpy as jnp
from jax import lax
from jax.experimental import pallas as pl
from jax.experimental.pallas import tpu as pltpu

BN_EPS = 1e-5
VMEM_LIMIT_BYTES = 48 * 1024 * 1024  # headroom under v7x's 64 MiB physical VMEM


# ---------------------------------------------------------------------------
# Kernels
# ---------------------------------------------------------------------------
def _linear1_stats_kernel(x_ref, w1_ref, h_ref, sum_ref, sumsq_ref):
    """h_tile = x_tile @ W1 (bf16 MXU, f32 acc) + per-tile partial BN stats."""
    x = x_ref[...].astype(jnp.bfloat16)          # no-op if x already bf16
    w1 = w1_ref[...].astype(jnp.bfloat16)        # no-op: params pre-cast to bf16
    h = jnp.dot(x, w1, preferred_element_type=jnp.float32)       # (TB, H) f32
    h_ref[...] = h.astype(h_ref.dtype)                           # store bf16
    # Per-tile partial stats from the f32 accumulator (no cross-tile carry,
    # so the batch grid axis stays "parallel").
    sum_ref[...] = jnp.sum(h, axis=0, keepdims=True).reshape(sum_ref.shape)
    sumsq_ref[...] = jnp.sum(h * h, axis=0, keepdims=True).reshape(sumsq_ref.shape)


def _bn_relu_linear2_kernel(h_ref, scale_ref, shift_ref, w2_ref, b2_ref, o_ref):
    """out_tile = relu(h_tile * scale + shift) @ W2 + b2 (BN folded)."""
    h = h_ref[...].astype(jnp.float32)                       # bf16 -> f32 for BN
    a = jnp.maximum(h * scale_ref[...] + shift_ref[...], 0.0)
    w2 = w2_ref[...].astype(jnp.bfloat16)                    # no-op if pre-cast
    out = jnp.dot(a.astype(jnp.bfloat16), w2, preferred_element_type=jnp.float32)
    o_ref[...] = (out + b2_ref[...]).astype(o_ref.dtype)


# ---------------------------------------------------------------------------
# Wrapper
# ---------------------------------------------------------------------------
def _pick_batch_tile(batch):
    """Largest clean batch tile (cap 1024: VMEM-safe on v7x, good HBM roofline)."""
    if batch <= 1024:
        return batch
    for tb in (1024, 512, 256, 128, 64, 32, 16, 8):
        if batch % tb == 0:
            return tb
    return batch  # fallback: single block


def prediction_mlp_forward(x, params, *, batch_tile=None, out_dtype=jnp.float32):
    """x: (B, in_dim) float32 or bfloat16. params: dict (see init_params)."""
    B, in_dim = x.shape
    hidden = params["w1"].shape[1]
    out_dim = params["w2"].shape[1]

    tb = batch_tile if batch_tile is not None else _pick_batch_tile(B)
    assert B % tb == 0, f"batch {B} must be divisible by batch tile {tb}"
    num_tiles = B // tb
    grid = (num_tiles,)

    # Weights passed through as stored (bf16 via prepare_params); kernels cast
    # as a fallback.  No per-call wrapper astype (would be an un-hidden HBM pass).
    w1 = params["w1"]
    w2 = params["w2"]
    b2 = params["b2"].astype(jnp.float32)

    # ---- pass 1: h = x @ W1 (bf16 out) + per-tile partial column stats -----
    h, part_sum, part_sumsq = pl.pallas_call(
        _linear1_stats_kernel,
        grid=grid,
        in_specs=[
            pl.BlockSpec((tb, in_dim), lambda i: (i, 0)),        # x tile
            pl.BlockSpec((in_dim, hidden), lambda i: (0, 0)),    # W1 resident
        ],
        out_specs=(
            pl.BlockSpec((tb, hidden), lambda i: (i, 0)),        # h tile (bf16)
            pl.BlockSpec((1, 1, hidden), lambda i: (i, 0, 0)),   # partial sum
            pl.BlockSpec((1, 1, hidden), lambda i: (i, 0, 0)),   # partial sumsq
        ),
        out_shape=(
            jax.ShapeDtypeStruct((B, hidden), jnp.bfloat16),
            jax.ShapeDtypeStruct((num_tiles, 1, hidden), jnp.float32),
            jax.ShapeDtypeStruct((num_tiles, 1, hidden), jnp.float32),
        ),
        compiler_params=pltpu.CompilerParams(
            dimension_semantics=("parallel",),   # independent tiles -> 2 TCs on v7x
            vmem_limit_bytes=VMEM_LIMIT_BYTES),
    )(x, w1)

    # ---- fold training-mode BatchNorm1d into per-column scale/shift --------
    # (tiny (num_tiles, H) -> (1, H) work; plain JAX between the two calls)
    col_sum = jnp.sum(part_sum, axis=0)          # (1, H)
    col_sumsq = jnp.sum(part_sumsq, axis=0)      # (1, H)
    inv_b = jnp.float32(1.0 / B)
    mean = col_sum * inv_b
    # NOTE: E[h^2]-E[h]^2 in f32; fine for standardized inputs/near-init
    # weights, can cancel if |mean| >> std (Welford would fix, at extra cost).
    var = jnp.maximum(col_sumsq * inv_b - mean * mean, 0.0)
    scale = params["gamma"].astype(jnp.float32) * lax.rsqrt(var + BN_EPS)
    shift = params["beta"].astype(jnp.float32) - mean * scale
    # layer1's Linear bias is cancelled by BN's mean subtraction -> never applied.

    # ---- pass 2: out = relu(h*scale + shift) @ W2 + b2 ---------------------
    out = pl.pallas_call(
        _bn_relu_linear2_kernel,
        grid=grid,
        in_specs=[
            pl.BlockSpec((tb, hidden), lambda i: (i, 0)),        # h tile (bf16)
            pl.BlockSpec((1, hidden), lambda i: (0, 0)),         # scale
            pl.BlockSpec((1, hidden), lambda i: (0, 0)),         # shift
            pl.BlockSpec((hidden, out_dim), lambda i: (0, 0)),   # W2 resident
            pl.BlockSpec((1, out_dim), lambda i: (0, 0)),        # b2
        ],
        out_specs=pl.BlockSpec((tb, out_dim), lambda i: (i, 0)),
        out_shape=jax.ShapeDtypeStruct((B, out_dim), out_dtype),
        compiler_params=pltpu.CompilerParams(
            dimension_semantics=("parallel",),
            vmem_limit_bytes=VMEM_LIMIT_BYTES),
    )(h, scale, shift, w2, b2)

    return out


# ---------------------------------------------------------------------------
# Params / reference
# ---------------------------------------------------------------------------
def init_params(key, in_dim, hidden_dim, out_dim):
    """Deterministic synthetic init (PyTorch-like uniform fan-in scaling), f32."""
    k1, k2, k3, k4 = jax.random.split(key, 4)
    bound1 = 1.0 / jnp.sqrt(in_dim)
    bound2 = 1.0 / jnp.sqrt(hidden_dim)
    return {
        # stored transposed relative to nn.Linear.weight -> (in, out)
        "w1": jax.random.uniform(k1, (in_dim, hidden_dim), jnp.float32,
                                 -bound1, bound1),
        "b1": jax.random.uniform(k2, (1, hidden_dim), jnp.float32,
                                 -bound1, bound1),
        # BatchNorm1d affine params (PyTorch init: gamma=1, beta=0)
        "gamma": jnp.ones((1, hidden_dim), jnp.float32),
        "beta": jnp.zeros((1, hidden_dim), jnp.float32),
        "w2": jax.random.uniform(k3, (hidden_dim, out_dim), jnp.float32,
                                 -bound2, bound2),
        "b2": jax.random.uniform(k4, (1, out_dim), jnp.float32,
                                 -bound2, bound2),
    }


def prepare_params(params):
    """One-time (outside jit) bf16 cast of the matmul weights for the kernels."""
    p = dict(params)
    p["w1"] = params["w1"].astype(jnp.bfloat16)
    p["w2"] = params["w2"].astype(jnp.bfloat16)
    return p


def reference_forward(x, params):
    """Pure-JAX f32 reference mirroring the PyTorch forward (training-mode BN)."""
    h = x @ params["w1"] + params["b1"]       # bias kept here; cancelled by BN
    mean = jnp.mean(h, axis=0, keepdims=True)
    var = jnp.mean((h - mean) ** 2, axis=0, keepdims=True)
    h = (h - mean) / jnp.sqrt(var + BN_EPS)
    h = h * params["gamma"] + params["beta"]
    h = jnp.maximum(h, 0.0)
    return h @ params["w2"] + params["b2"]


# TODO(synk): BatchNorm1d running_mean/running_var buffer updates (a training
# side effect, not part of the forward output) are not modeled.

if __name__ == "__main__":
    # Small shapes consistent with the module's bottleneck structure
    # (real module: in=2048, hidden=512, out=2048; here scaled down).
    # batch_tile=16 with B=32 exercises the tiled grid + per-tile partial stats.
    B, IN_DIM, HIDDEN_DIM, OUT_DIM = 32, 32, 16, 32

    key = jax.random.PRNGKey(0)
    kx, kp = jax.random.split(key)
    x = jax.random.normal(kx, (B, IN_DIM), jnp.float32)
    params_f32 = init_params(kp, IN_DIM, HIDDEN_DIM, OUT_DIM)  # f32 (reference)
    params = prepare_params(params_f32)                        # bf16 weights, once

    fwd = jax.jit(functools.partial(prediction_mlp_forward, batch_tile=16))
    out = jax.block_until_ready(fwd(x, params))

    ref = reference_forward(x, params_f32)
    assert out.shape == (B, OUT_DIM)
    # bf16 MXU operands + bf16 intermediate h -> bf16-level tolerance vs f32 ref.
    assert jnp.allclose(out, ref, atol=5e-2, rtol=5e-2), "mismatch vs reference"

    print("KERNEL_OK")
</pallas_src>

<mosaic_0001>
module attributes {stable_mosaic.version = 11 : i64} {
  func.func @_linear1_stats_kernel(%arg0: i32, %arg1: memref<16x32xf32, #tpu.memory_space<vmem>>, %arg2: memref<32x16xbf16, #tpu.memory_space<vmem>>, %arg3: memref<16x16xbf16, #tpu.memory_space<vmem>>, %arg4: memref<1x1x16xf32, #tpu.memory_space<vmem>>, %arg5: memref<1x1x16xf32, #tpu.memory_space<vmem>>) attributes {dimension_semantics = [#tpu.dimension_semantics<parallel>], iteration_bounds = array<i64: 2>, scalar_prefetch = 0 : i64, scratch_operands = 0 : i64, tpu.core_type = #tpu.core_type<tc>, window_params = [{transform_indices = @transform_0, window_bounds = array<i64: 16, 32>}, {pipeline_mode = #tpu.pipeline_mode<synchronous>, transform_indices = @transform_1, window_bounds = array<i64: 32, 16>}, {transform_indices = @transform_2, window_bounds = array<i64: 16, 16>}, {transform_indices = @transform_3, window_bounds = array<i64: 1, 1, 16>}, {transform_indices = @transform_4, window_bounds = array<i64: 1, 1, 16>}]} {
    %c0 = arith.constant 0 : index
    %c0_0 = arith.constant 0 : index
    %0 = vector.load %arg1[%c0, %c0_0] : memref<16x32xf32, #tpu.memory_space<vmem>>, vector<16x32xf32>
    %1 = arith.truncf %0 : vector<16x32xf32> to vector<16x32xbf16>
    %c0_1 = arith.constant 0 : index
    %c0_2 = arith.constant 0 : index
    %2 = vector.load %arg2[%c0_1, %c0_2] : memref<32x16xbf16, #tpu.memory_space<vmem>>, vector<32x16xbf16>
    %cst = arith.constant dense<0.000000e+00> : vector<16x16xf32>
    %3 = tpu.matmul %1, %2, %cst {dimension_numbers = #tpu.dot_dimension_numbers<[1], [0], [0], [1], [0, 0, 1, 1], [], []>} : vector<16x32xbf16>, vector<32x16xbf16>, vector<16x16xf32> -> vector<16x16xf32>
    %4 = arith.truncf %3 : vector<16x16xf32> to vector<16x16xbf16>
    %c0_3 = arith.constant 0 : index
    %c0_4 = arith.constant 0 : index
    %5 = vector.load %arg3[%c0_3, %c0_4] : memref<16x16xbf16, #tpu.memory_space<vmem>>, vector<16x16xbf16>
    tpu.vector_store %arg3[%c0_3, %c0_4], %4 {strides = array<i32>} : memref<16x16xbf16, #tpu.memory_space<vmem>>, vector<16x16xbf16>,
    %cst_5 = arith.constant dense<0.000000e+00> : vector<16xf32>
    %6 = vector.multi_reduction <add>, %3, %cst_5 [0] : vector<16x16xf32> to vector<16xf32>
    %7 = vector.shape_cast %6 : vector<16xf32> to vector<1x16xf32>
    %8 = vector.shape_cast %7 : vector<1x16xf32> to vector<1x1x16xf32>
    %c0_6 = arith.constant 0 : index
    %c0_7 = arith.constant 0 : index
    %c0_8 = arith.constant 0 : index
    %9 = vector.load %arg4[%c0_6, %c0_7, %c0_8] : memref<1x1x16xf32, #tpu.memory_space<vmem>>, vector<1x1x16xf32>
    tpu.vector_store %arg4[%c0_6, %c0_7, %c0_8], %8 {strides = array<i32>} : memref<1x1x16xf32, #tpu.memory_space<vmem>>, vector<1x1x16xf32>,
    %10 = arith.mulf %3, %3 : vector<16x16xf32>
    %cst_9 = arith.constant dense<0.000000e+00> : vector<16xf32>
    %11 = vector.multi_reduction <add>, %10, %cst_9 [0] : vector<16x16xf32> to vector<16xf32>
    %12 = vector.shape_cast %11 : vector<16xf32> to vector<1x16xf32>
    %13 = vector.shape_cast %12 : vector<1x16xf32> to vector<1x1x16xf32>
    %c0_10 = arith.constant 0 : index
    %c0_11 = arith.constant 0 : index
    %c0_12 = arith.constant 0 : index
    %14 = vector.load %arg5[%c0_10, %c0_11, %c0_12] : memref<1x1x16xf32, #tpu.memory_space<vmem>>, vector<1x1x16xf32>
    tpu.vector_store %arg5[%c0_10, %c0_11, %c0_12], %13 {strides = array<i32>} : memref<1x1x16xf32, #tpu.memory_space<vmem>>, vector<1x1x16xf32>,
    return
  }
  func.func @transform_0(%arg0: i32) -> (i32, i32) {
    %c0_i32 = arith.constant 0 : i32
    %c0_i32_0 = arith.constant 0 : i32
    return %arg0, %c0_i32 : i32, i32
  }
  func.func @transform_1(%arg0: i32) -> (i32, i32) {
    %c0_i32 = arith.constant 0 : i32
    %c0_i32_0 = arith.constant 0 : i32
    %c0_i32_1 = arith.constant 0 : i32
    return %c0_i32, %c0_i32_0 : i32, i32
  }
  func.func @transform_2(%arg0: i32) -> (i32, i32) {
    %c0_i32 = arith.constant 0 : i32
    %c0_i32_0 = arith.constant 0 : i32
    return %arg0, %c0_i32 : i32, i32
  }
  func.func @transform_3(%arg0: i32) -> (i32, i32, i32) {
    %c0_i32 = arith.constant 0 : i32
    %c0_i32_0 = arith.constant 0 : i32
    %c0_i32_1 = arith.constant 0 : i32
    return %arg0, %c0_i32, %c0_i32_0 : i32, i32, i32
  }
  func.func @transform_4(%arg0: i32) -> (i32, i32, i32) {
    %c0_i32 = arith.constant 0 : i32
    %c0_i32_0 = arith.constant 0 : i32
    %c0_i32_1 = arith.constant 0 : i32
    return %arg0, %c0_i32, %c0_i32_0 : i32, i32, i32
  }
}

module attributes {stable_mosaic.version = 11 : i64} {
  func.func @_bn_relu_linear2_kernel(%arg0: i32, %arg1: memref<16x16xbf16, #tpu.memory_space<vmem>>, %arg2: memref<1x16xf32, #tpu.memory_space<vmem>>, %arg3: memref<1x16xf32, #tpu.memory_space<vmem>>, %arg4: memref<16x32xbf16, #tpu.memory_space<vmem>>, %arg5: memref<1x32xf32, #tpu.memory_space<vmem>>, %arg6: memref<16x32xf32, #tpu.memory_space<vmem>>) attributes {dimension_semantics = [#tpu.dimension_semantics<parallel>], iteration_bounds = array<i64: 2>, scalar_prefetch = 0 : i64, scratch_operands = 0 : i64, tpu.core_type = #tpu.core_type<tc>, window_params = [{transform_indices = @transform_0, window_bounds = array<i64: 16, 16>}, {pipeline_mode = #tpu.pipeline_mode<synchronous>, transform_indices = @transform_1, window_bounds = array<i64: 1, 16>}, {pipeline_mode = #tpu.pipeline_mode<synchronous>, transform_indices = @transform_2, window_bounds = array<i64: 1, 16>}, {pipeline_mode = #tpu.pipeline_mode<synchronous>, transform_indices = @transform_3, window_bounds = array<i64: 16, 32>}, {pipeline_mode = #tpu.pipeline_mode<synchronous>, transform_indices = @transform_4, window_bounds = array<i64: 1, 32>}, {transform_indices = @transform_5, window_bounds = array<i64: 16, 32>}]} {
    %c0 = arith.constant 0 : index
    %c0_0 = arith.constant 0 : index
    %0 = vector.load %arg1[%c0, %c0_0] : memref<16x16xbf16, #tpu.memory_space<vmem>>, vector<16x16xbf16>
    %1 = arith.extf %0 : vector<16x16xbf16> to vector<16x16xf32>
    %c0_1 = arith.constant 0 : index
    %c0_2 = arith.constant 0 : index
    %2 = vector.load %arg2[%c0_1, %c0_2] : memref<1x16xf32, #tpu.memory_space<vmem>>, vector<1x16xf32>
    %3 = vector.broadcast %2 : vector<1x16xf32> to vector<16x16xf32>
    %4 = arith.mulf %1, %3 : vector<16x16xf32>
    %c0_3 = arith.constant 0 : index
    %c0_4 = arith.constant 0 : index
    %5 = vector.load %arg3[%c0_3, %c0_4] : memref<1x16xf32, #tpu.memory_space<vmem>>, vector<1x16xf32>
    %6 = vector.broadcast %5 : vector<1x16xf32> to vector<16x16xf32>
    %7 = arith.addf %4, %6 : vector<16x16xf32>
    %cst = arith.constant 0.000000e+00 : f32
    %8 = vector.broadcast %cst : f32 to vector<16x16xf32>
    %9 = arith.maximumf %7, %8 : vector<16x16xf32>
    %c0_5 = arith.constant 0 : index
    %c0_6 = arith.constant 0 : index
    %10 = vector.load %arg4[%c0_5, %c0_6] : memref<16x32xbf16, #tpu.memory_space<vmem>>, vector<16x32xbf16>
    %11 = arith.truncf %9 : vector<16x16xf32> to vector<16x16xbf16>
    %cst_7 = arith.constant dense<0.000000e+00> : vector<16x32xf32>
    %12 = tpu.matmul %11, %10, %cst_7 {dimension_numbers = #tpu.dot_dimension_numbers<[1], [0], [0], [1], [0, 0, 1, 1], [], []>} : vector<16x16xbf16>, vector<16x32xbf16>, vector<16x32xf32> -> vector<16x32xf32>
    %c0_8 = arith.constant 0 : index
    %c0_9 = arith.constant 0 : index
    %13 = vector.load %arg5[%c0_8, %c0_9] : memref<1x32xf32, #tpu.memory_space<vmem>>, vector<1x32xf32>
    %14 = vector.broadcast %13 : vector<1x32xf32> to vector<16x32xf32>
    %15 = arith.addf %12, %14 : vector<16x32xf32>
    %c0_10 = arith.constant 0 : index
    %c0_11 = arith.constant 0 : index
    %16 = vector.load %arg6[%c0_10, %c0_11] : memref<16x32xf32, #tpu.memory_space<vmem>>, vector<16x32xf32>
    tpu.vector_store %arg6[%c0_10, %c0_11], %15 {strides = array<i32>} : memref<16x32xf32, #tpu.memory_space<vmem>>, vector<16x32xf32>,
    return
  }
  func.func @transform_0(%arg0: i32) -> (i32, i32) {
    %c0_i32 = arith.constant 0 : i32
    %c0_i32_0 = arith.constant 0 : i32
    return %arg0, %c0_i32 : i32, i32
  }
  func.func @transform_1(%arg0: i32) -> (i32, i32) {
    %c0_i32 = arith.constant 0 : i32
    %c0_i32_0 = arith.constant 0 : i32
    %c0_i32_1 = arith.constant 0 : i32
    return %c0_i32, %c0_i32_0 : i32, i32
  }
  func.func @transform_2(%arg0: i32) -> (i32, i32) {
    %c0_i32 = arith.constant 0 : i32
    %c0_i32_0 = arith.constant 0 : i32
    %c0_i32_1 = arith.constant 0 : i32
    return %c0_i32, %c0_i32_0 : i32, i32
  }
  func.func @transform_3(%arg0: i32) -> (i32, i32) {
    %c0_i32 = arith.constant 0 : i32
    %c0_i32_0 = arith.constant 0 : i32
    %c0_i32_1 = arith.constant 0 : i32
    return %c0_i32, %c0_i32_0 : i32, i32
  }
  func.func @transform_4(%arg0: i32) -> (i32, i32) {
    %c0_i32 = arith.constant 0 : i32
    %c0_i32_0 = arith.constant 0 : i32
    %c0_i32_1 = arith.constant 0 : i32
    return %c0_i32, %c0_i32_0 : i32, i32
  }
  func.func @transform_5(%arg0: i32) -> (i32, i32) {
    %c0_i32 = arith.constant 0 : i32
    %c0_i32_0 = arith.constant 0 : i32
    return %arg0, %c0_i32 : i32, i32
  }
}

</mosaic_0001>

<llo_original>
// kernel: prediction_mlp_forward.2
$region0: #{prediction_mlp_forward.2}
  #allocation0 [shape = 'u32[]', space=smem, size = 0x4, offset = 0x4, fixed_abs, tag = 'smem constant byte address 0x4 - core index']
  #allocation1 [shape = 'u32[144,128]{1,0:T(1,128)}', space=vmem, size = 0x12000, scoped, tag = 'internal scratch']
  %s0 = inlined_call_operand.hbm [shape: f32[32,32], index: 0, kind: input, shape index: {}]
  %s1 = inlined_call_operand.vmem [shape: bf16[32,16], index: 1, kind: input, shape index: {}]
  %s2 = inlined_call_operand.vmem [shape: bf16[32,16], index: 2, kind: output, shape index: {0}]
  %s3 = inlined_call_operand.vmem [shape: f32[2,1,16], index: 3, kind: output, shape index: {1}]
  %s4 = inlined_call_operand.vmem [shape: f32[2,1,16], index: 4, kind: output, shape index: {2}]
  %5 = xla_tuple %s2, %s3, %s4
  %s6 = sld [smem:[#allocation0]]
  $region61: #{prediction_mlp_forward.2} parent=0
    _
  %s8 = ssub.s32 1, %s6
  %s9 = scalar_select 0, %s8, %s6
  $region1: #{prediction_mlp_forward.2} parent=0
    #allocation2 [shape = 'u8[16384]{0}', space=vmem, size = 0x4000, scoped, tag = 'input window, operand 0']
    #allocation3 [shape = 's32[2]{0}', space=sflag, size = 0x8, scoped, tag = 'scoped memory for prediction_mlp_forward.2']
    %10 = vsyncpa [#allocation3], 0
    %s11 = scalar_lea.sflag [#allocation3], 1
    %12 = vsyncpa %s11, 0
    loop: start=0, step=1, limit=4
    $region2: #{prediction_mlp_forward.2} parent=1 // loop_pre_header
      _
    $region3: #{prediction_mlp_forward.2} parent=1 // loop_header
      %s14 = sphi 0, %s18
      %p15 = scmp.ge.s32.totalorder %s14, 4
      %s24 = sphi 0, %s26
      %s27 = sphi 0, %s24
      %s28 = sphi 0, %s27
      %s44 = sphi 0, %s28
      %s48 = sphi 0, %s48
      %s50 = sphi 0, %s48
      %s51 = sphi 0, %s50
      %s65 = sphi 0, %s51
      %s71 = sphi 0, %s73
      %s74 = sphi 0, %s71
      %s75 = sphi 0, %s74
      %s91 = sphi 0, %s75
      %s97 = sphi 0, %s99
      %s100 = sphi 0, %s97
      %s101 = sphi 0, %s100
      %s117 = sphi 0, %s101
      %s123 = sphi 0, %s125
      %s126 = sphi 0, %s123
      %s127 = sphi 0, %s126
      %s143 = sphi 0, %s127
    $region4: #{prediction_mlp_forward.2} parent=1 // loop_header_branch
      %17 = sbr.rel (%p15) target = $region8
    $region5: #{prediction_mlp_forward.2} parent=1 // loop_body
      %s19 = ssub.s32 %s14, 1
      %s20 = ssub.s32 %s14, 2
      %s21 = sadd.s32 %s14, 1
      %s22 = ssub.s32 %s14, %s21
      %p23 = scmp.eq.s32.totalorder %s22, 0
      %s25 = sadd.s32 %s24, 1
      %s26 = scalar_select %p23, %s24, %s25
      %p29 = pneg %p23
      %p30 = scmp.eq.s32.totalorder %s14, 1
      %p31 = por %p29, %p30
      %p32 = scmp.ne.s32.totalorder %s24, %s27
      %p33 = scmp.eq.s32.totalorder %s14, 0
      %p34 = por %p32, %p33
      %p35 = scmp.ne.s32.totalorder %s24, %s27
      %p36 = scmp.eq.s32.totalorder %s19, 1
      %p37 = por %p35, %p36
      %p38 = scmp.ne.s32.totalorder %s27, %s28
      %p39 = scmp.eq.s32.totalorder %s19, 0
      %p40 = por %p38, %p39
      %p41 = scmp.ne.s32.totalorder %s27, %s28
      %p42 = scmp.eq.s32.totalorder %s20, 1
      %p43 = por %p41, %p42
      %p45 = scmp.ne.s32.totalorder %s28, %s44
      %p46 = scmp.eq.s32.totalorder %s20, 0
      %p47 = por %p45, %p46
      %s49 = sadd.s32 %s48, 1
      %p52 = scmp.eq.s32.totalorder %s14, 1
      %p53 = scmp.ne.s32.totalorder %s48, %s50
      %p54 = scmp.eq.s32.totalorder %s14, 0
      %p55 = por %p53, %p54
      %p56 = scmp.ne.s32.totalorder %s48, %s50
      %p57 = scmp.eq.s32.totalorder %s19, 1
      %p58 = por %p56, %p57
      %p59 = scmp.ne.s32.totalorder %s50, %s51
      %p60 = scmp.eq.s32.totalorder %s19, 0
      %p61 = por %p59, %p60
      %p62 = scmp.ne.s32.totalorder %s50, %s51
      %p63 = scmp.eq.s32.totalorder %s20, 1
      %p64 = por %p62, %p63
      %p66 = scmp.ne.s32.totalorder %s51, %s65
      %p67 = scmp.eq.s32.totalorder %s20, 0
      %p68 = por %p66, %p67
      %s69 = ssub.s32 %s14, %s21
      %p70 = scmp.eq.s32.totalorder %s69, 0
      %s72 = sadd.s32 %s71, 1
      %s73 = scalar_select %p70, %s71, %s72
      %p76 = pneg %p70
      %p77 = scmp.eq.s32.totalorder %s14, 1
      %p78 = por %p76, %p77
      %p79 = scmp.ne.s32.totalorder %s71, %s74
      %p80 = scmp.eq.s32.totalorder %s14, 0
      %p81 = por %p79, %p80
      %p82 = scmp.ne.s32.totalorder %s71, %s74
      %p83 = scmp.eq.s32.totalorder %s19, 1
      %p84 = por %p82, %p83
      %p85 = scmp.ne.s32.totalorder %s74, %s75
      %p86 = scmp.eq.s32.totalorder %s19, 0
      %p87 = por %p85, %p86
      %p88 = scmp.ne.s32.totalorder %s74, %s75
      %p89 = scmp.eq.s32.totalorder %s20, 1
      %p90 = por %p88, %p89
      %p92 = scmp.ne.s32.totalorder %s75, %s91
      %p93 = scmp.eq.s32.totalorder %s20, 0
      %p94 = por %p92, %p93
      %s95 = ssub.s32 %s14, %s21
      %p96 = scmp.eq.s32.totalorder %s95, 0
      %s98 = sadd.s32 %s97, 1
      %s99 = scalar_select %p96, %s97, %s98
      %p102 = pneg %p96
      %p103 = scmp.eq.s32.totalorder %s14, 1
      %p104 = por %p102, %p103
      %p105 = scmp.ne.s32.totalorder %s97, %s100
      %p106 = scmp.eq.s32.totalorder %s14, 0
      %p107 = por %p105, %p106
      %p108 = scmp.ne.s32.totalorder %s97, %s100
      %p109 = scmp.eq.s32.totalorder %s19, 1
      %p110 = por %p108, %p109
      %p111 = scmp.ne.s32.totalorder %s100, %s101
      %p112 = scmp.eq.s32.totalorder %s19, 0
      %p113 = por %p111, %p112
      %p114 = scmp.ne.s32.totalorder %s100, %s101
      %p115 = scmp.eq.s32.totalorder %s20, 1
      %p116 = por %p114, %p115
      %p118 = scmp.ne.s32.totalorder %s101, %s117
      %p119 = scmp.eq.s32.totalorder %s20, 0
      %p120 = por %p118, %p119
      %s121 = ssub.s32 %s14, %s21
      %p122 = scmp.eq.s32.totalorder %s121, 0
      %s124 = sadd.s32 %s123, 1
      %s125 = scalar_select %p122, %s123, %s124
      %p128 = pneg %p122
      %p129 = scmp.eq.s32.totalorder %s14, 1
      %p130 = por %p128, %p129
      %p131 = scmp.ne.s32.totalorder %s123, %s126
      %p132 = scmp.eq.s32.totalorder %s14, 0
      %p133 = por %p131, %p132
      %p134 = scmp.ne.s32.totalorder %s123, %s126
      %p135 = scmp.eq.s32.totalorder %s19, 1
      %p136 = por %p134, %p135
      %p137 = scmp.ne.s32.totalorder %s126, %s127
      %p138 = scmp.eq.s32.totalorder %s19, 0
      %p139 = por %p137, %p138
      %p140 = scmp.ne.s32.totalorder %s126, %s127
      %p141 = scmp.eq.s32.totalorder %s20, 1
      %p142 = por %p140, %p141
      %p144 = scmp.ne.s32.totalorder %s127, %s143
      %p145 = scmp.eq.s32.totalorder %s20, 0
      %p146 = por %p144, %p145
      %p147 = scmp.le.s32.totalorder 1, %s14
      %p148 = scmp.lt.s32.totalorder %s14, 3
      %p149 = pnand %p147, %p148
      %p150 = pneg %p149
      // Predicated region
      $region9: #{prediction_mlp_forward.2} parent=5 // pred_check
        _
      $region10: #{prediction_mlp_forward.2} parent=5 // pred_check_branch
        %152 = sbr.rel (%p149) target = $region12
      $region11: #{prediction_mlp_forward.2} parent=5 // pred_region
        %s153 = ssub.s32 %s14, 1
        // Predicated region
        $region13: #{prediction_mlp_forward.2} parent=11 // pred_check
          %p154 = pneg %p61
        $region14: #{prediction_mlp_forward.2} parent=11 // pred_check_branch
          %156 = sbr.rel (%p154) target = $region16
        $region15: #{prediction_mlp_forward.2} parent=11 // pred_region
          _
        $region16: #{prediction_mlp_forward.2} parent=11 // pred_fallthru
          _
      $region12: #{prediction_mlp_forward.2} parent=5 // pred_fallthru
        _
      %p157 = scmp.lt.s32.totalorder %s14, 2
      // Predicated region
      $region17: #{prediction_mlp_forward.2} parent=5 // pred_check
        %p158 = pneg %p157
      $region18: #{prediction_mlp_forward.2} parent=5 // pred_check_branch
        %160 = sbr.rel (%p158) target = $region20
      $region19: #{prediction_mlp_forward.2} parent=5 // pred_region
        // Predicated region
        $region21: #{prediction_mlp_forward.2} parent=19 // pred_check
          %p161 = pneg %p34
        $region22: #{prediction_mlp_forward.2} parent=19 // pred_check_branch
          %163 = sbr.rel (%p161) target = $region24
        $region23: #{prediction_mlp_forward.2} parent=19 // pred_region
          %s164 = sand.u32 %s24, 1
          %s165 = scalar_lea.sflag [#allocation3], %s164
          %s166 = sand.u32 %s24, 1
          %s167 = smul.addr %s166, 16
          %s168 = scalar_lea.vmem [#allocation2], %s167
          %s169 = smul.u32 2, %s14
          %s171 = ssub.s32 256, 256
          %172 = vsyncadd %s165, %s171
          %s173 = smul.addr %s169, 128
          %s174 = scalar_lea.hbm %s0, %s173
          %s175 = sshll.u32 %s168, 4
          %s176 = int_to_ptr.vmem [resolvable:$true] %s175
          %181 = dma.hbm_to_vmem [thread:$0]  %s174, 256, %s176, %s165, 128, 128, 8
        $region24: #{prediction_mlp_forward.2} parent=19 // pred_fallthru
          _
      $region20: #{prediction_mlp_forward.2} parent=5 // pred_fallthru
        _
      %p182 = scmp.le.s32.totalorder 1, %s14
      %p183 = scmp.lt.s32.totalorder %s14, 3
      %p184 = pnand %p182, %p183
      %p185 = pneg %p184
      // Predicated region
      $region25: #{prediction_mlp_forward.2} parent=5 // pred_check
        _
      $region26: #{prediction_mlp_forward.2} parent=5 // pred_check_branch
        %187 = sbr.rel (%p184) target = $region28
      $region27: #{prediction_mlp_forward.2} parent=5 // pred_region
        %s188 = ssub.s32 %s14, 1
        %s189 = sand.u32 %s27, 1
        %s190 = scalar_lea.sflag [#allocation3], %s189
        %s191 = sand.u32 %s27, 1
        %s192 = smul.addr %s191, 16
        %s193 = scalar_lea.vmem [#allocation2], %s192
        // Predicated region
        $region29: #{prediction_mlp_forward.2} parent=27 // pred_check
          %p194 = pneg %p40
        $region30: #{prediction_mlp_forward.2} parent=27 // pred_check_branch
          %196 = sbr.rel (%p194) target = $region32
        $region31: #{prediction_mlp_forward.2} parent=27 // pred_region
          %197 = dma.done %s190, 256
        $region32: #{prediction_mlp_forward.2} parent=27 // pred_fallthru
          _
        %s198 = sand.u32 %s27, 1
        %s199 = scalar_lea.sflag [#allocation3], %s198
        %s200 = sand.u32 %s27, 1
        %s201 = smul.addr %s200, 16
        %s202 = scalar_lea.vmem [#allocation2], %s201
        %p203 = pneg %p40
        %p204 = pneg %p37
        %p205 = pneg %p61
        %p206 = pneg %p58
        %p207 = pneg %p87
        %p208 = pneg %p84
        %s209 = smul.u32 2, %s19
        %p210 = scmp.lt.s32.totalorder %s209, 3
        %s211 = scalar_select %p210, %s209, 3
        %s212 = smul.addr %s211, 4
        %s213 = scalar_lea.vmem %s2, %s212
        %p214 = pneg %p113
        %p215 = pneg %p110
        %p216 = scmp.lt.s32.totalorder %s19, 1
        %s217 = scalar_select %p216, %s19, 1
        %s218 = scalar_lea.vmem %s3, %s217
        %p219 = pneg %p139
        %p220 = pneg %p136
        %p221 = scmp.lt.s32.totalorder %s19, 1
        %s222 = scalar_select %p221, %s19, 1
        %s223 = scalar_lea.vmem %s4, %s222
        %s224 = smul.u32 2, %s19
        %s225 = smul.u32 2, %s19
        %p226 = scmp.lt.s32.totalorder %s225, 3
        %s227 = scalar_select %p226, %s225, 3
        %s228 = smul.addr %s227, 4
        %s229 = scalar_lea.vmem %s2, %s228
        %s230 = smul.u32 2, %s19
        %p231 = scmp.lt.s32.totalorder %s19, 1
        %s232 = scalar_select %p231, %s19, 1
        %s233 = scalar_lea.vmem %s3, %s232
        %p234 = scmp.lt.s32.totalorder %s19, 1
        %s235 = scalar_select %p234, %s19, 1
        %s236 = scalar_lea.vmem %s4, %s235
        %v238 = vld [vmem:[%s193] sm:$0xff]
        %v239 = vld [vmem:[%s193 + $0x8] sm:$0xff]
        %v240 = vpack.c.bf16 %v239, %v238
        %v241 = vld [vmem:[%s1] sm:$0xf]
        %v242 = vld [vmem:[%s1 + $0x4] sm:$0xf]
        %v243 = vld [vmem:[%s1 + $0x8] sm:$0xf]
        %v244 = vld [vmem:[%s1 + $0xc] sm:$0xf]
        %v249 = vunpack.c.l.b16 %v241
        %v250 = vunpack.c.l.b16 %v242
        %v251 = vunpack.c.l.b16 %v243
        %v252 = vunpack.c.l.b16 %v244
        %v253 = vpack.c.b16 %v250, %v249
        %v254 = vpack.c.b16 %v252, %v251
        %vm257 = vcmask 261120
        %v259 = vsel %vm257, %v240, 0
        %261 = vmatprep.subr.bf16.mxu0 0
        %262 = vmatpush1.bf16.msra.mxu0 %v253
        %263 = vmatprep.subr.bf16.mxu0 0
        %264 = vmatpush1.bf16.msra.mxu0 %v254
        %265 = vmatprep.subr.bf16.mxu0 0
        %266 = vmatpush1.bf16.msra.mxu0 0
        %267 = vmatprep.subr.bf16.mxu0 0
        %268 = vmatpush1.bf16.msra.mxu0 0
        %269 = vmatprep.subr.bf16.mxu0 0
        %270 = vmatpush1.bf16.msra.mxu0 0
        %271 = vmatprep.subr.bf16.mxu0 0
        %272 = vmatpush1.bf16.msra.mxu0 0
        %273 = vmatprep.subr.bf16.mxu0 0
        %274 = vmatpush1.bf16.msra.mxu0 0
        %275 = vmatprep.subr.bf16.mxu0 0
        %276 = vmatpush1.bf16.msra.mxu0 0
        %277 = vmatprep.subr.bf16.mxu0 0
        %278 = vmatpush1.bf16.msra.mxu0 0
        %279 = vmatprep.subr.bf16.mxu0 0
        %280 = vmatpush1.bf16.msra.mxu0 0
        %281 = vmatprep.subr.bf16.mxu0 0
        %282 = vmatpush1.bf16.msra.mxu0 0
        %283 = vmatprep.subr.bf16.mxu0 0
        %284 = vmatpush1.bf16.msra.mxu0 0
        %285 = vmatprep.subr.bf16.mxu0 0
        %286 = vmatpush1.bf16.msra.mxu0 0
        %287 = vmatprep.subr.bf16.mxu0 0
        %288 = vmatpush1.bf16.msra.mxu0 0
        %289 = vmatprep.subr.bf16.mxu0 0
        %290 = vmatpush1.bf16.msra.mxu0 0
        %291 = vmatprep.subr.bf16.mxu0 0
        %292 = vmatpush1.bf16.msra.mxu0 0
        %293 = vmatprep.mubr.bf16.mxu0 0
        %294 = vmatmul.mubr.bf16.gmra.mrb[0].mxu0 %v259
        %v295 = vpop.f32.mrb[0].mxu0
        %v296 = vadd.f32 0.0, %v295
        %v297 = vpop.f32.mrb[0].mxu0
        %v298 = vpop.f32.mrb[0].mxu0
        %v299 = vadd.f32 0.0, %v298
        %v300 = vpop.f32.mrb[0].mxu0
        %301 = vdwg.mxu0
        %v302 = vpack.c.bf16 %v299, %v296
        %v304 = vunpack.c.l.b16 %v302
        %v305 = vunpack.c.h.b16 %v302
        %v306 = vpack.c.b16 %v304, %v304
        %v307 = vpack.c.b16 %v305, %v305
        %vm310 = vcmask 125952
        %311 = vst.msk [vmem:[%s229] sm:$0xf] %vm310, %v306
        %312 = vst.msk [vmem:[%s229 + $0x4] sm:$0xf] %vm310, %v307
        %vm313 = vcmask 130048
        %v314 = vsel %vm313, %v296, 0.0
        %v315 = vsel %vm313, %v299, 0.0
        %v316 = vadd.f32 %v314, %v315
        %v317 = vrot.slane %v316, 4
        %v318 = vadd.f32 %v316, %v317
        %v319 = vrot.slane %v318, 2
        %v320 = vadd.f32 %v318, %v319
        %v321 = vrot.slane %v320, 1
        %v322 = vadd.f32 %v320, %v321
        %vm323 = vcmask 122880
        %324 = vst.msk [vmem:[%s233] sm:$0x1] %vm323, %v322
        %v325 = vmul.f32 %v296, %v296
        %v326 = vmul.f32 %v299, %v299
        %v327 = vsel %vm313, %v325, 0.0
        %v328 = vsel %vm313, %v326, 0.0
        %v329 = vadd.f32 %v327, %v328
        %v330 = vrot.slane %v329, 4
        %v331 = vadd.f32 %v329, %v330
        %v332 = vrot.slane %v331, 2
        %v333 = vadd.f32 %v331, %v332
        %v334 = vrot.slane %v333, 1
        %v335 = vadd.f32 %v333, %v334
        %336 = vst.msk [vmem:[%s236] sm:$0x1] %vm323, %v335
        %s337 = smul.u32 2, %s19
        %p338 = scmp.lt.s32.totalorder %s337, 3
        %s339 = scalar_select %p338, %s337, 3
        %s340 = smul.addr %s339, 4
        %s341 = scalar_lea.vmem %s2, %s340
        %p342 = scmp.lt.s32.totalorder %s19, 1
        %s343 = scalar_select %p342, %s19, 1
        %s344 = scalar_lea.vmem %s3, %s343
        %p345 = scmp.lt.s32.totalorder %s19, 1
        %s346 = scalar_select %p345, %s19, 1
        %s347 = scalar_lea.vmem %s4, %s346
        // Predicated region
        $region33: #{prediction_mlp_forward.2} parent=27 // pred_check
          %p348 = pneg %p84
        $region34: #{prediction_mlp_forward.2} parent=27 // pred_check_branch
          %350 = sbr.rel (%p348) target = $region36
        $region35: #{prediction_mlp_forward.2} parent=27 // pred_region
          %s351 = smul.u32 2, %s19
        $region36: #{prediction_mlp_forward.2} parent=27 // pred_fallthru
          _
        // Predicated region
        $region37: #{prediction_mlp_forward.2} parent=27 // pred_check
          %p352 = pneg %p110
        $region38: #{prediction_mlp_forward.2} parent=27 // pred_check_branch
          %354 = sbr.rel (%p352) target = $region40
        $region39: #{prediction_mlp_forward.2} parent=27 // pred_region
          _
        $region40: #{prediction_mlp_forward.2} parent=27 // pred_fallthru
          _
        // Predicated region
        $region41: #{prediction_mlp_forward.2} parent=27 // pred_check
          %p355 = pneg %p136
        $region42: #{prediction_mlp_forward.2} parent=27 // pred_check_branch
          %357 = sbr.rel (%p355) target = $region44
        $region43: #{prediction_mlp_forward.2} parent=27 // pred_region
          _
        $region44: #{prediction_mlp_forward.2} parent=27 // pred_fallthru
          _
      $region28: #{prediction_mlp_forward.2} parent=5 // pred_fallthru
        _
      %p358 = scmp.le.s32.totalorder 2, %s14
      // Predicated region
      $region45: #{prediction_mlp_forward.2} parent=5 // pred_check
        %p359 = pneg %p358
      $region46: #{prediction_mlp_forward.2} parent=5 // pred_check_branch
        %361 = sbr.rel (%p359) target = $region48
      $region47: #{prediction_mlp_forward.2} parent=5 // pred_region
        %s362 = ssub.s32 %s14, 2
        // Predicated region
        $region49: #{prediction_mlp_forward.2} parent=47 // pred_check
          %p363 = pneg %p90
        $region50: #{prediction_mlp_forward.2} parent=47 // pred_check_branch
          %365 = sbr.rel (%p363) target = $region52
        $region51: #{prediction_mlp_forward.2} parent=47 // pred_region
          %s366 = smul.u32 2, %s20
          %p367 = scmp.lt.s32.totalorder %s366, 3
          %s368 = scalar_select %p367, %s366, 3
          %s369 = smul.addr %s368, 4
          %s370 = scalar_lea.vmem %s2, %s369
        $region52: #{prediction_mlp_forward.2} parent=47 // pred_fallthru
          _
        // Predicated region
        $region53: #{prediction_mlp_forward.2} parent=47 // pred_check
          %p371 = pneg %p116
        $region54: #{prediction_mlp_forward.2} parent=47 // pred_check_branch
          %373 = sbr.rel (%p371) target = $region56
        $region55: #{prediction_mlp_forward.2} parent=47 // pred_region
          %p374 = scmp.lt.s32.totalorder %s20, 1
          %s375 = scalar_select %p374, %s20, 1
          %s376 = scalar_lea.vmem %s3, %s375
        $region56: #{prediction_mlp_forward.2} parent=47 // pred_fallthru
          _
        // Predicated region
        $region57: #{prediction_mlp_forward.2} parent=47 // pred_check
          %p377 = pneg %p142
        $region58: #{prediction_mlp_forward.2} parent=47 // pred_check_branch
          %379 = sbr.rel (%p377) target = $region60
        $region59: #{prediction_mlp_forward.2} parent=47 // pred_region
          %p380 = scmp.lt.s32.totalorder %s20, 1
          %s381 = scalar_select %p380, %s20, 1
          %s382 = scalar_lea.vmem %s4, %s381
        $region60: #{prediction_mlp_forward.2} parent=47 // pred_fallthru
          _
      $region48: #{prediction_mlp_forward.2} parent=5 // pred_fallthru
        _
    $region6: #{prediction_mlp_forward.2} parent=1 // loop_footer
      %s18 = sadd.s32 1, %s14
    $region7: #{prediction_mlp_forward.2} parent=1 // loop_footer_branch
      %13 = sbr.rel target = $region3
    $region8: #{prediction_mlp_forward.2} parent=1 // loop_exit
      _
    %383 = vsyncpa [#allocation3], 1
    %s384 = scalar_lea.sflag [#allocation3], 1
    %385 = vsyncpa %s384, 1

// kernel: prediction_mlp_forward.3
$region0: #{prediction_mlp_forward.3}
  #allocation0 [shape = 'u32[]', space=smem, size = 0x4, offset = 0x4, fixed_abs, tag = 'smem constant byte address 0x4 - core index']
  #allocation1 [shape = 'u32[144,128]{1,0:T(1,128)}', space=vmem, size = 0x12000, scoped, tag = 'internal scratch']
  %s0 = inlined_call_operand.vmem [shape: bf16[32,16], index: 0, kind: input, shape index: {}]
  %s1 = inlined_call_operand.vmem [shape: f32[1,16], index: 1, kind: input, shape index: {}]
  %s2 = inlined_call_operand.vmem [shape: f32[1,16], index: 2, kind: input, shape index: {}]
  %s3 = inlined_call_operand.vmem [shape: bf16[16,32], index: 3, kind: input, shape index: {}]
  %s4 = inlined_call_operand.vmem [shape: f32[1,32], index: 4, kind: input, shape index: {}]
  %s5 = inlined_call_operand.hbm [shape: f32[32,32], index: 5, kind: output, shape index: {}]
  %s6 = sld [smem:[#allocation0]]
  $region53: #{prediction_mlp_forward.3} parent=0
    _
  %s8 = ssub.s32 1, %s6
  %s9 = scalar_select 0, %s8, %s6
  $region1: #{prediction_mlp_forward.3} parent=0
    #allocation2 [shape = 'u8[16384]{0}', space=vmem, size = 0x4000, scoped, tag = 'output window, operand 0']
    #allocation3 [shape = 's32[2]{0}', space=sflag, size = 0x8, scoped, tag = 'scoped memory for prediction_mlp_forward.3']
    %10 = vsyncpa [#allocation3], 0
    %s11 = scalar_lea.sflag [#allocation3], 1
    %12 = vsyncpa %s11, 0
    loop: start=0, step=1, limit=4
    $region2: #{prediction_mlp_forward.3} parent=1 // loop_pre_header
      _
    $region3: #{prediction_mlp_forward.3} parent=1 // loop_header
      %s14 = sphi 0, %s18
      %p15 = scmp.ge.s32.totalorder %s14, 4
      %s24 = sphi 0, %s26
      %s27 = sphi 0, %s24
      %s28 = sphi 0, %s27
      %s44 = sphi 0, %s28
      %s48 = sphi 0, %s48
      %s50 = sphi 0, %s48
      %s51 = sphi 0, %s50
      %s65 = sphi 0, %s51
      %s69 = sphi 0, %s69
      %s71 = sphi 0, %s69
      %s72 = sphi 0, %s71
      %s86 = sphi 0, %s72
      %s90 = sphi 0, %s90
      %s92 = sphi 0, %s90
      %s93 = sphi 0, %s92
      %s107 = sphi 0, %s93
      %s111 = sphi 0, %s111
      %s113 = sphi 0, %s111
      %s114 = sphi 0, %s113
      %s128 = sphi 0, %s114
      %s134 = sphi 0, %s136
      %s137 = sphi 0, %s134
      %s138 = sphi 0, %s137
      %s154 = sphi 0, %s138
    $region4: #{prediction_mlp_forward.3} parent=1 // loop_header_branch
      %17 = sbr.rel (%p15) target = $region8
    $region5: #{prediction_mlp_forward.3} parent=1 // loop_body
      %s19 = ssub.s32 %s14, 1
      %s20 = ssub.s32 %s14, 2
      %s21 = sadd.s32 %s14, 1
      %s22 = ssub.s32 %s14, %s21
      %p23 = scmp.eq.s32.totalorder %s22, 0
      %s25 = sadd.s32 %s24, 1
      %s26 = scalar_select %p23, %s24, %s25
      %p29 = pneg %p23
      %p30 = scmp.eq.s32.totalorder %s14, 1
      %p31 = por %p29, %p30
      %p32 = scmp.ne.s32.totalorder %s24, %s27
      %p33 = scmp.eq.s32.totalorder %s14, 0
      %p34 = por %p32, %p33
      %p35 = scmp.ne.s32.totalorder %s24, %s27
      %p36 = scmp.eq.s32.totalorder %s19, 1
      %p37 = por %p35, %p36
      %p38 = scmp.ne.s32.totalorder %s27, %s28
      %p39 = scmp.eq.s32.totalorder %s19, 0
      %p40 = por %p38, %p39
      %p41 = scmp.ne.s32.totalorder %s27, %s28
      %p42 = scmp.eq.s32.totalorder %s20, 1
      %p43 = por %p41, %p42
      %p45 = scmp.ne.s32.totalorder %s28, %s44
      %p46 = scmp.eq.s32.totalorder %s20, 0
      %p47 = por %p45, %p46
      %s49 = sadd.s32 %s48, 1
      %p52 = scmp.eq.s32.totalorder %s14, 1
      %p53 = scmp.ne.s32.totalorder %s48, %s50
      %p54 = scmp.eq.s32.totalorder %s14, 0
      %p55 = por %p53, %p54
      %p56 = scmp.ne.s32.totalorder %s48, %s50
      %p57 = scmp.eq.s32.totalorder %s19, 1
      %p58 = por %p56, %p57
      %p59 = scmp.ne.s32.totalorder %s50, %s51
      %p60 = scmp.eq.s32.totalorder %s19, 0
      %p61 = por %p59, %p60
      %p62 = scmp.ne.s32.totalorder %s50, %s51
      %p63 = scmp.eq.s32.totalorder %s20, 1
      %p64 = por %p62, %p63
      %p66 = scmp.ne.s32.totalorder %s51, %s65
      %p67 = scmp.eq.s32.totalorder %s20, 0
      %p68 = por %p66, %p67
      %s70 = sadd.s32 %s69, 1
      %p73 = scmp.eq.s32.totalorder %s14, 1
      %p74 = scmp.ne.s32.totalorder %s69, %s71
      %p75 = scmp.eq.s32.totalorder %s14, 0
      %p76 = por %p74, %p75
      %p77 = scmp.ne.s32.totalorder %s69, %s71
      %p78 = scmp.eq.s32.totalorder %s19, 1
      %p79 = por %p77, %p78
      %p80 = scmp.ne.s32.totalorder %s71, %s72
      %p81 = scmp.eq.s32.totalorder %s19, 0
      %p82 = por %p80, %p81
      %p83 = scmp.ne.s32.totalorder %s71, %s72
      %p84 = scmp.eq.s32.totalorder %s20, 1
      %p85 = por %p83, %p84
      %p87 = scmp.ne.s32.totalorder %s72, %s86
      %p88 = scmp.eq.s32.totalorder %s20, 0
      %p89 = por %p87, %p88
      %s91 = sadd.s32 %s90, 1
      %p94 = scmp.eq.s32.totalorder %s14, 1
      %p95 = scmp.ne.s32.totalorder %s90, %s92
      %p96 = scmp.eq.s32.totalorder %s14, 0
      %p97 = por %p95, %p96
      %p98 = scmp.ne.s32.totalorder %s90, %s92
      %p99 = scmp.eq.s32.totalorder %s19, 1
      %p100 = por %p98, %p99
      %p101 = scmp.ne.s32.totalorder %s92, %s93
      %p102 = scmp.eq.s32.totalorder %s19, 0
      %p103 = por %p101, %p102
      %p104 = scmp.ne.s32.totalorder %s92, %s93
      %p105 = scmp.eq.s32.totalorder %s20, 1
      %p106 = por %p104, %p105
      %p108 = scmp.ne.s32.totalorder %s93, %s107
      %p109 = scmp.eq.s32.totalorder %s20, 0
      %p110 = por %p108, %p109
      %s112 = sadd.s32 %s111, 1
      %p115 = scmp.eq.s32.totalorder %s14, 1
      %p116 = scmp.ne.s32.totalorder %s111, %s113
      %p117 = scmp.eq.s32.totalorder %s14, 0
      %p118 = por %p116, %p117
      %p119 = scmp.ne.s32.totalorder %s111, %s113
      %p120 = scmp.eq.s32.totalorder %s19, 1
      %p121 = por %p119, %p120
      %p122 = scmp.ne.s32.totalorder %s113, %s114
      %p123 = scmp.eq.s32.totalorder %s19, 0
      %p124 = por %p122, %p123
      %p125 = scmp.ne.s32.totalorder %s113, %s114
      %p126 = scmp.eq.s32.totalorder %s20, 1
      %p127 = por %p125, %p126
      %p129 = scmp.ne.s32.totalorder %s114, %s128
      %p130 = scmp.eq.s32.totalorder %s20, 0
      %p131 = por %p129, %p130
      %s132 = ssub.s32 %s14, %s21
      %p133 = scmp.eq.s32.totalorder %s132, 0
      %s135 = sadd.s32 %s134, 1
      %s136 = scalar_select %p133, %s134, %s135
      %p139 = pneg %p133
      %p140 = scmp.eq.s32.totalorder %s14, 1
      %p141 = por %p139, %p140
      %p142 = scmp.ne.s32.totalorder %s134, %s137
      %p143 = scmp.eq.s32.totalorder %s14, 0
      %p144 = por %p142, %p143
      %p145 = scmp.ne.s32.totalorder %s134, %s137
      %p146 = scmp.eq.s32.totalorder %s19, 1
      %p147 = por %p145, %p146
      %p148 = scmp.ne.s32.totalorder %s137, %s138
      %p149 = scmp.eq.s32.totalorder %s19, 0
      %p150 = por %p148, %p149
      %p151 = scmp.ne.s32.totalorder %s137, %s138
      %p152 = scmp.eq.s32.totalorder %s20, 1
      %p153 = por %p151, %p152
      %p155 = scmp.ne.s32.totalorder %s138, %s154
      %p156 = scmp.eq.s32.totalorder %s20, 0
      %p157 = por %p155, %p156
      %p158 = scmp.le.s32.totalorder 1, %s14
      %p159 = scmp.lt.s32.totalorder %s14, 3
      %p160 = pnand %p158, %p159
      %p161 = pneg %p160
      // Predicated region
      $region9: #{prediction_mlp_forward.3} parent=5 // pred_check
        _
      $region10: #{prediction_mlp_forward.3} parent=5 // pred_check_branch
        %163 = sbr.rel (%p160) target = $region12
      $region11: #{prediction_mlp_forward.3} parent=5 // pred_region
        %s164 = ssub.s32 %s14, 1
        // Predicated region
        $region13: #{prediction_mlp_forward.3} parent=11 // pred_check
          %p165 = pneg %p61
        $region14: #{prediction_mlp_forward.3} parent=11 // pred_check_branch
          %167 = sbr.rel (%p165) target = $region16
        $region15: #{prediction_mlp_forward.3} parent=11 // pred_region
          _
        $region16: #{prediction_mlp_forward.3} parent=11 // pred_fallthru
          _
        // Predicated region
        $region17: #{prediction_mlp_forward.3} parent=11 // pred_check
          %p168 = pneg %p82
        $region18: #{prediction_mlp_forward.3} parent=11 // pred_check_branch
          %170 = sbr.rel (%p168) target = $region20
        $region19: #{prediction_mlp_forward.3} parent=11 // pred_region
          _
        $region20: #{prediction_mlp_forward.3} parent=11 // pred_fallthru
          _
        // Predicated region
        $region21: #{prediction_mlp_forward.3} parent=11 // pred_check
          %p171 = pneg %p103
        $region22: #{prediction_mlp_forward.3} parent=11 // pred_check_branch
          %173 = sbr.rel (%p171) target = $region24
        $region23: #{prediction_mlp_forward.3} parent=11 // pred_region
          _
        $region24: #{prediction_mlp_forward.3} parent=11 // pred_fallthru
          _
        // Predicated region
        $region25: #{prediction_mlp_forward.3} parent=11 // pred_check
          %p174 = pneg %p124
        $region26: #{prediction_mlp_forward.3} parent=11 // pred_check_branch
          %176 = sbr.rel (%p174) target = $region28
        $region27: #{prediction_mlp_forward.3} parent=11 // pred_region
          _
        $region28: #{prediction_mlp_forward.3} parent=11 // pred_fallthru
          _
      $region12: #{prediction_mlp_forward.3} parent=5 // pred_fallthru
        _
      %p177 = scmp.lt.s32.totalorder %s14, 2
      // Predicated region
      $region29: #{prediction_mlp_forward.3} parent=5 // pred_check
        %p178 = pneg %p177
      $region30: #{prediction_mlp_forward.3} parent=5 // pred_check_branch
        %180 = sbr.rel (%p178) target = $region32
      $region31: #{prediction_mlp_forward.3} parent=5 // pred_region
        // Predicated region
        $region33: #{prediction_mlp_forward.3} parent=31 // pred_check
          %p181 = pneg %p34
        $region34: #{prediction_mlp_forward.3} parent=31 // pred_check_branch
          %183 = sbr.rel (%p181) target = $region36
        $region35: #{prediction_mlp_forward.3} parent=31 // pred_region
          %s184 = smul.u32 2, %s14
          %p185 = scmp.lt.s32.totalorder %s184, 3
          %s186 = scalar_select %p185, %s184, 3
          %s187 = smul.addr %s186, 4
          %s188 = scalar_lea.vmem %s0, %s187
          %s189 = smul.u32 2, %s14
        $region36: #{prediction_mlp_forward.3} parent=31 // pred_fallthru
          _
      $region32: #{prediction_mlp_forward.3} parent=5 // pred_fallthru
        _
      %p190 = scmp.le.s32.totalorder 1, %s14
      %p191 = scmp.lt.s32.totalorder %s14, 3
      %p192 = pnand %p190, %p191
      %p193 = pneg %p192
      // Predicated region
      $region37: #{prediction_mlp_forward.3} parent=5 // pred_check
        _
      $region38: #{prediction_mlp_forward.3} parent=5 // pred_check_branch
        %195 = sbr.rel (%p192) target = $region40
      $region39: #{prediction_mlp_forward.3} parent=5 // pred_region
        %s196 = ssub.s32 %s14, 1
        %s197 = smul.u32 2, %s19
        %p198 = scmp.lt.s32.totalorder %s197, 3
        %s199 = scalar_select %p198, %s197, 3
        %s200 = smul.addr %s199, 4
        %s201 = scalar_lea.vmem %s0, %s200
        %p202 = pneg %p40
        %p203 = pneg %p37
        %p204 = pneg %p61
        %p205 = pneg %p58
        %p206 = pneg %p82
        %p207 = pneg %p79
        %p208 = pneg %p103
        %p209 = pneg %p100
        %p210 = pneg %p124
        %p211 = pneg %p121
        %p212 = pneg %p150
        %p213 = pneg %p147
        %s214 = sand.u32 %s137, 1
        %s215 = scalar_lea.sflag [#allocation3], %s214
        %s216 = sand.u32 %s137, 1
        %s217 = smul.addr %s216, 16
        %s218 = scalar_lea.vmem [#allocation2], %s217
        %s219 = smul.u32 2, %s19
        %p220 = scmp.lt.s32.totalorder %s219, 3
        %s221 = scalar_select %p220, %s219, 3
        %s222 = smul.addr %s221, 4
        %s223 = scalar_lea.vmem %s0, %s222
        %s224 = smul.u32 2, %s19
        %s225 = smul.u32 2, %s19
        %v227 = vld [vmem:[%s223] sm:$0xf]
        %v228 = vld [vmem:[%s223 + $0x4] sm:$0xf]
        %v229 = vunpack.c.l.bf16 %v227
        %v230 = vunpack.c.l.bf16 %v228
        %v231 = vld [vmem:[%s1] sm:$0x1]
        %v233 = vlaneseq
        %v234 = vshrl.u32 %v233, 7
        %v235 = vsub.s32 0, %v234
        %v236 = vrot.slane %v231, %v235
        %v238 = vmul.f32 %v229, %v236
        %v239 = vmul.f32 %v230, %v236
        %v240 = vld [vmem:[%s2] sm:$0x1]
        %v242 = vlaneseq
        %v243 = vshrl.u32 %v242, 7
        %v244 = vsub.s32 0, %v243
        %v245 = vrot.slane %v240, %v244
        %v247 = vadd.f32 %v238, %v245
        %v248 = vadd.f32 %v239, %v245
        %v249 = vmax.f32 %v247, 0.0
        %v250 = vmax.f32 %v248, 0.0
        %v251 = vld [vmem:[%s3] sm:$0xf]
        %v252 = vld [vmem:[%s3 + $0x4] sm:$0xf]
        %v253 = vpack.c.bf16 %v250, %v249
        %v254 = vld [vmem:[%s4] sm:$0x1]
        %v256 = vlaneseq
        %v257 = vshrl.u32 %v256, 7
        %v258 = vsub.s32 0, %v257
        %v259 = vrot.slane %v254, %v258
        %v263 = vunpack.c.l.b16 %v251
        %v264 = vunpack.c.l.b16 %v252
        %v265 = vpack.c.b16 %v264, %v263
        %vm267 = vcmask 130048
        %v269 = vsel %vm267, %v253, 0
        %271 = vmatprep.subr.bf16.mxu0 0
        %272 = vmatpush1.bf16.msra.mxu0 %v265
        %273 = vmatprep.subr.bf16.mxu0 0
        %274 = vmatpush1.bf16.msra.mxu0 0
        %275 = vmatprep.subr.bf16.mxu0 0
        %276 = vmatpush1.bf16.msra.mxu0 0
        %277 = vmatprep.subr.bf16.mxu0 0
        %278 = vmatpush1.bf16.msra.mxu0 0
        %279 = vmatprep.subr.bf16.mxu0 0
        %280 = vmatpush1.bf16.msra.mxu0 0
        %281 = vmatprep.subr.bf16.mxu0 0
        %282 = vmatpush1.bf16.msra.mxu0 0
        %283 = vmatprep.subr.bf16.mxu0 0
        %284 = vmatpush1.bf16.msra.mxu0 0
        %285 = vmatprep.subr.bf16.mxu0 0
        %286 = vmatpush1.bf16.msra.mxu0 0
        %287 = vmatprep.subr.bf16.mxu0 0
        %288 = vmatpush1.bf16.msra.mxu0 0
        %289 = vmatprep.subr.bf16.mxu0 0
        %290 = vmatpush1.bf16.msra.mxu0 0
        %291 = vmatprep.subr.bf16.mxu0 0
        %292 = vmatpush1.bf16.msra.mxu0 0
        %293 = vmatprep.subr.bf16.mxu0 0
        %294 = vmatpush1.bf16.msra.mxu0 0
        %295 = vmatprep.subr.bf16.mxu0 0
        %296 = vmatpush1.bf16.msra.mxu0 0
        %297 = vmatprep.subr.bf16.mxu0 0
        %298 = vmatpush1.bf16.msra.mxu0 0
        %299 = vmatprep.subr.bf16.mxu0 0
        %300 = vmatpush1.bf16.msra.mxu0 0
        %301 = vmatprep.subr.bf16.mxu0 0
        %302 = vmatpush1.bf16.msra.mxu0 0
        %303 = vmatprep.mubr.bf16.mxu0 0
        %304 = vmatmul.mubr.bf16.gmra.mrb[0].mxu0 %v269
        %v305 = vpop.f32.mrb[0].mxu0
        %v306 = vadd.f32 %v259, %v305
        %v307 = vpop.f32.mrb[0].mxu0
        %v308 = vpop.f32.mrb[0].mxu0
        %v309 = vadd.f32 %v259, %v308
        %v310 = vpop.f32.mrb[0].mxu0
        %311 = vdwg.mxu0
        %vm312 = vcmask 261120
        %313 = vst.msk [vmem:[%s218] sm:$0xff] %vm312, %v306
        %314 = vst.msk [vmem:[%s218 + $0x8] sm:$0xff] %vm312, %v309
        %s315 = sand.u32 %s137, 1
        %s316 = scalar_lea.sflag [#allocation3], %s315
        %s317 = sand.u32 %s137, 1
        %s318 = smul.addr %s317, 16
        %s319 = scalar_lea.vmem [#allocation2], %s318
        // Predicated region
        $region41: #{prediction_mlp_forward.3} parent=39 // pred_check
          %p320 = pneg %p147
        $region42: #{prediction_mlp_forward.3} parent=39 // pred_check_branch
          %322 = sbr.rel (%p320) target = $region44
        $region43: #{prediction_mlp_forward.3} parent=39 // pred_region
          %s323 = smul.u32 2, %s19
          %s325 = ssub.s32 256, 256
          %326 = vsyncadd %s316, %s325
          %s327 = smul.addr %s323, 128
          %s328 = scalar_lea.hbm %s5, %s327
          %s329 = sshll.u32 %s319, 4
          %s330 = int_to_ptr.vmem [resolvable:$true] %s329
          %335 = dma.vmem_to_hbm [thread:$0]  %s330, 256, %s328, %s316, 128, 128, 8
        $region44: #{prediction_mlp_forward.3} parent=39 // pred_fallthru
          _
      $region40: #{prediction_mlp_forward.3} parent=5 // pred_fallthru
        _
      %p336 = scmp.le.s32.totalorder 2, %s14
      // Predicated region
      $region45: #{prediction_mlp_forward.3} parent=5 // pred_check
        %p337 = pneg %p336
      $region46: #{prediction_mlp_forward.3} parent=5 // pred_check_branch
        %339 = sbr.rel (%p337) target = $region48
      $region47: #{prediction_mlp_forward.3} parent=5 // pred_region
        %s340 = ssub.s32 %s14, 2
        // Predicated region
        $region49: #{prediction_mlp_forward.3} parent=47 // pred_check
          %p341 = pneg %p153
        $region50: #{prediction_mlp_forward.3} parent=47 // pred_check_branch
          %343 = sbr.rel (%p341) target = $region52
        $region51: #{prediction_mlp_forward.3} parent=47 // pred_region
          %s344 = sand.u32 %s138, 1
          %s345 = scalar_lea.sflag [#allocation3], %s344
          %s346 = sand.u32 %s138, 1
          %s347 = smul.addr %s346, 16
          %s348 = scalar_lea.vmem [#allocation2], %s347
          %349 = dma.done %s345, 256
        $region52: #{prediction_mlp_forward.3} parent=47 // pred_fallthru
          _
      $region48: #{prediction_mlp_forward.3} parent=5 // pred_fallthru
        _
    $region6: #{prediction_mlp_forward.3} parent=1 // loop_footer
      %s18 = sadd.s32 1, %s14
    $region7: #{prediction_mlp_forward.3} parent=1 // loop_footer_branch
      %13 = sbr.rel target = $region3
    $region8: #{prediction_mlp_forward.3} parent=1 // loop_exit
      _
    %350 = vsyncpa [#allocation3], 1
    %s351 = scalar_lea.sflag [#allocation3], 1
    %352 = vsyncpa %s351, 1

</llo_original>
